<compile_context>
chip_gen: v7x
topology: tpu7x:2x2x1
jax: 0.10.0
libtpu: 0.0.40
codegen_flags: <defaults>
</compile_context>

<pallas_src>
import jax
import jax.numpy as jnp
from jax import lax
from jax.experimental import pallas as pl
from jax.experimental.pallas import tpu as pltpu


def _choose_tile_n(N, dim, heads, d, J,
                   max_tile=1024,
                   budget_bytes=20 * 1024 * 1024):
    """Largest multiple of 128 dividing N whose per-step VMEM footprint fits.

    Footprint model (f32 = 4 B):
      - double-buffered input tile  : 2 * dim * TN
      - double-buffered output tile : 2 * dim * TN
      - double-buffered idx tile    : 2 * heads * TN
      - in-kernel temporaries       : logits (J,TN) + iota (J,TN) + onehot (J,TN)
                                      + out (d,TN)
    Resident k / vT are excluded (grid-invariant, counted once by the caller).
    If nothing fits / divides, fall back to a single full-N tile (block dim ==
    array dim is always legal).
    """
    for tn in range(max_tile, 0, -128):
        if N % tn != 0:
            continue
        per_step = 4 * tn * (4 * dim + 2 * heads + 3 * J + d)
        if per_step <= budget_bytes:
            return tn
    return N


def _memcodes_kernel(qT_ref, k_ref, vT_ref, outT_ref, idx_ref):
    """One (batch, N-tile) grid step.

    qT_ref:   (1, heads, d, TN)  f32   query tile, channels-major (== NCHW slice)
    k_ref:    (heads, J, d)      f32   to_k(codes)    (grid-invariant, resident)
    vT_ref:   (heads, d, J)      f32   to_v(codes)^T  (grid-invariant, resident)
    outT_ref: (1, heads, d, TN)  f32   quantized output tile (channels-major)
    idx_ref:  (1, heads, TN)     int32 codebook indices
    """
    heads, J, _ = k_ref.shape
    tn = qT_ref.shape[-1]

    # Hoisted once per grid step: JAX does not CSE broadcast_in_dim, and the
    # head loop below is a static unroll.
    j_iota = lax.broadcasted_iota(jnp.int32, (J, tn), 0)              # (J, TN)

    for h in range(heads):                     # static unroll; heads is small
        qT = qT_ref[0, h]                      # (d, TN)
        k = k_ref[h]                           # (J, d)
        vT = vT_ref[h]                         # (d, J)

        # logits^T = K @ Q^T -> (J, TN).  NN dot_general on the MXU.
        # (The module's q * scale is dropped: argmax is invariant to a positive
        #  scalar and the output is a pure gather, so results are identical.)
        logits_t = lax.dot_general(
            k, qT, (((1,), (0,)), ((), ())),
            preferred_element_type=jnp.float32)                        # (J, TN)

        # argmax over the codebook axis (sublane axis) with torch-style
        # first-occurrence tie-breaking.  Sublane reductions decompose into
        # elementwise VPU max/min across vregs + a small XLU finish.
        m = jnp.max(logits_t, axis=0, keepdims=True)                   # (1, TN)
        idx = jnp.min(jnp.where(logits_t == m, j_iota, J),
                      axis=0, keepdims=True)                           # (1, TN) int32

        # One-hot built directly in the (J, TN) layout the second matmul needs.
        attn_t = (j_iota == idx).astype(jnp.float32)                   # (J, TN)

        # out^T = V^T @ onehot^T -> (d, TN): gather of the selected code rows,
        # stored lane-dense (last dim TN is a multiple of 128).
        out_t = lax.dot_general(
            vT, attn_t, (((1,), (0,)), ((), ())),
            preferred_element_type=jnp.float32)                        # (d, TN)

        outT_ref[0, h] = out_t.astype(outT_ref.dtype)
        idx_ref[0, h] = idx[0]


def memcodes_forward(x, codes, w_k, w_v, *, heads, temperature=1.0):
    """Eval-mode Memcodes forward.

    x:      (B, C, H, W) float32, C == dim
    codes:  (heads, codebook_size, d)
    w_k:    (heads, d, d)  Mix('h n d -> h n c', 'h d c') weight for to_k
    w_v:    (heads, d, d)  Mix weight for to_v
    returns (out (B, C, H, W), codebook_loss (1,), indices)
    """
    # TODO(synk): training-mode gumbel-softmax branch not implemented (eval forward only).
    del temperature  # only used by gumbel softmax in training mode
    B, C, H, W = x.shape
    dim = C
    assert dim % heads == 0, "dimension must be divisible by number of heads"
    d = dim // heads
    N = H * W
    J = codes.shape[1]

    # Mix layers (parameter mixing) — tiny, grid-invariant; done once in XLA.
    k = jnp.einsum("hnd,hdc->hnc", codes, w_k)      # (heads, J, d)
    vT = jnp.einsum("hnd,hdc->hcn", codes, w_v)     # (heads, d, J)  (to_v, pre-transposed)

    # NCHW is already the channels-major (d, N) layout the kernel wants:
    # pure reshape, zero transposes.
    qT = x.reshape(B, heads, d, N)                  # (B, heads, d, N)

    TN = _choose_tile_n(N, dim, heads, d, J)
    n_tiles = N // TN

    grid_spec = pltpu.PrefetchScalarGridSpec(
        num_scalar_prefetch=0,
        grid=(B, n_tiles),
        in_specs=[
            pl.BlockSpec((1, heads, d, TN), lambda b, n: (b, 0, 0, n)),
            # k / vT are grid-invariant: constant block index keeps them
            # resident in VMEM (no per-step re-DMA).
            pl.BlockSpec((heads, J, d), lambda b, n: (0, 0, 0)),
            pl.BlockSpec((heads, d, J), lambda b, n: (0, 0, 0)),
        ],
        out_specs=[
            pl.BlockSpec((1, heads, d, TN), lambda b, n: (b, 0, 0, n)),
            pl.BlockSpec((1, heads, TN), lambda b, n: (b, 0, n)),
        ],
    )

    outT, idx = pl.pallas_call(
        _memcodes_kernel,
        out_shape=(
            jax.ShapeDtypeStruct((B, heads, d, N), jnp.float32),
            jax.ShapeDtypeStruct((B, heads, N), jnp.int32),
        ),
        grid_spec=grid_spec,
        compiler_params=pltpu.CompilerParams(
            dimension_semantics=("parallel", "parallel"),
            vmem_limit_bytes=64 * 1024 * 1024,
        ),
    )(qT, k, vT)

    # (B, heads, d, N) -> (B, C, H, W): pure reshape (channel = h*d + dd).
    out = outT.reshape(B, dim, H, W)

    if heads == 1:
        indices = idx[:, 0, :].reshape(B, H, W)                 # (B, H, W)
    else:
        indices = idx.reshape(B, heads, H, W)                   # (B, heads, H, W)

    codebook_loss = jnp.zeros((1,), dtype=jnp.float32)
    return out, codebook_loss, indices


# ----------------------------------------------------------------------------
# Pure-JAX validation of the forward-pass semantics.
# ----------------------------------------------------------------------------
def _validate(x, codes, w_k, w_v, heads, out, loss, indices):
    B, C, H, W = x.shape
    d = C // heads
    N = H * W
    scale = float(d) ** (-0.5)

    k = jnp.einsum("hnd,hdc->hnc", codes, w_k)                       # (heads, J, d)
    v = jnp.einsum("hnd,hdc->hnc", codes, w_v)                       # (heads, J, d)
    q = jnp.transpose(x, (0, 2, 3, 1)).reshape(B, N, heads, d)
    q = jnp.transpose(q, (0, 2, 1, 3)) * scale                       # (B, heads, N, d)
    logits = jnp.einsum("bhid,hjd->bhij", q, k,
                        precision=jax.lax.Precision.HIGHEST)         # (B, heads, N, J)

    # Shapes / loss.
    assert out.shape == x.shape
    assert loss.shape == (1,) and float(loss[0]) == 0.0
    if heads == 1:
        assert indices.shape == (B, H, W)
        idx = indices.reshape(B, 1, N)
    else:
        assert indices.shape == (B, heads, H, W)
        idx = indices.reshape(B, heads, N)

    # 1) Kernel indices are (near-)maximal codes.  Tolerance covers MXU f32
    #    matmul rounding; a real indexing bug picks codes far below the max
    #    and fails decisively.
    picked = jnp.take_along_axis(logits, idx[..., None], axis=-1)[..., 0]
    max_l = jnp.max(logits, axis=-1)
    tol = 2e-2 * (1.0 + jnp.abs(max_l))
    assert bool(jnp.all(picked >= max_l - tol)), "kernel picked a non-maximal code"

    # ...and (up to floating-point near-ties) equal torch-style argmax.
    ref_idx = jnp.argmax(logits, axis=-1)
    mismatch_frac = float(jnp.mean((idx != ref_idx).astype(jnp.float32)))
    assert mismatch_frac < 5e-2, f"too many argmax mismatches: {mismatch_frac}"

    # 2) Output equals the gathered to_v(codes) rows for the kernel's indices.
    gathered = v[jnp.arange(heads)[None, :, None], idx, :]           # (B, heads, N, d)
    expected = jnp.transpose(gathered, (0, 1, 3, 2)).reshape(B, C, H, W)
    assert bool(jnp.allclose(out, expected, atol=1e-2, rtol=1e-2)), \
        "output does not match gathered code values"


if __name__ == "__main__":
    configs = [
        # B, dim, H, W, heads, codebook_size
        dict(B=2, dim=32, H=16, W=16, heads=1, codebook_size=128),   # single tile per batch
        dict(B=2, dim=64, H=32, W=32, heads=2, codebook_size=256),   # multi-tile, multi-head
    ]

    key = jax.random.PRNGKey(0)
    for cfg in configs:
        B, dim, H, W = cfg["B"], cfg["dim"], cfg["H"], cfg["W"]
        heads, J = cfg["heads"], cfg["codebook_size"]
        d = dim // heads

        key, kx, kc, kwk, kwv = jax.random.split(key, 5)
        x = jax.random.normal(kx, (B, dim, H, W), dtype=jnp.float32)
        codes = jax.random.normal(kc, (heads, J, d), dtype=jnp.float32)
        w_k = jax.random.normal(kwk, (heads, d, d), dtype=jnp.float32) * (d ** -0.5)
        w_v = jax.random.normal(kwv, (heads, d, d), dtype=jnp.float32) * (d ** -0.5)

        out, loss, indices = memcodes_forward(x, codes, w_k, w_v, heads=heads)
        out, loss, indices = jax.block_until_ready((out, loss, indices))

        _validate(x, codes, w_k, w_v, heads, out, loss, indices)

    print("KERNEL_OK")
</pallas_src>

<mosaic_0001>
module attributes {stable_mosaic.version = 11 : i64} {
  func.func @_memcodes_kernel(%arg0: i32, %arg1: i32, %arg2: memref<1x1x32x256xf32, #tpu.memory_space<vmem>>, %arg3: memref<1x128x32xf32, #tpu.memory_space<vmem>>, %arg4: memref<1x32x128xf32, #tpu.memory_space<vmem>>, %arg5: memref<1x1x32x256xf32, #tpu.memory_space<vmem>>, %arg6: memref<1x1x256xi32, #tpu.memory_space<vmem>>) attributes {dimension_semantics = [#tpu.dimension_semantics<parallel>, #tpu.dimension_semantics<parallel>], iteration_bounds = array<i64: 2, 1>, scalar_prefetch = 0 : i64, scratch_operands = 0 : i64, tpu.core_type = #tpu.core_type<tc>, window_params = [{transform_indices = @transform_0, window_bounds = array<i64: 1, 1, 32, 256>}, {pipeline_mode = #tpu.pipeline_mode<synchronous>, transform_indices = @transform_1, window_bounds = array<i64: 1, 128, 32>}, {pipeline_mode = #tpu.pipeline_mode<synchronous>, transform_indices = @transform_2, window_bounds = array<i64: 1, 32, 128>}, {transform_indices = @transform_3, window_bounds = array<i64: 1, 1, 32, 256>}, {transform_indices = @transform_4, window_bounds = array<i64: 1, 1, 256>}]} {
    %0 = tpu.iota {dimensions = array<i32: 0>} : vector<128x256xi32>
    %c0 = arith.constant 0 : index
    %c0_0 = arith.constant 0 : index
    %c0_1 = arith.constant 0 : index
    %c0_2 = arith.constant 0 : index
    %1 = vector.load %arg2[%c0, %c0_0, %c0_1, %c0_2] : memref<1x1x32x256xf32, #tpu.memory_space<vmem>>, vector<1x1x32x256xf32>
    %2 = vector.shape_cast %1 : vector<1x1x32x256xf32> to vector<32x256xf32>
    %c0_3 = arith.constant 0 : index
    %c0_4 = arith.constant 0 : index
    %c0_5 = arith.constant 0 : index
    %3 = vector.load %arg3[%c0_3, %c0_4, %c0_5] : memref<1x128x32xf32, #tpu.memory_space<vmem>>, vector<1x128x32xf32>
    %4 = vector.shape_cast %3 : vector<1x128x32xf32> to vector<128x32xf32>
    %c0_6 = arith.constant 0 : index
    %c0_7 = arith.constant 0 : index
    %c0_8 = arith.constant 0 : index
    %5 = vector.load %arg4[%c0_6, %c0_7, %c0_8] : memref<1x32x128xf32, #tpu.memory_space<vmem>>, vector<1x32x128xf32>
    %6 = vector.shape_cast %5 : vector<1x32x128xf32> to vector<32x128xf32>
    %cst = arith.constant dense<0.000000e+00> : vector<128x256xf32>
    %7 = tpu.matmul %4, %2, %cst {dimension_numbers = #tpu.dot_dimension_numbers<[1], [0], [0], [1], [0, 0, 1, 1], [], []>} : vector<128x32xf32>, vector<32x256xf32>, vector<128x256xf32> -> vector<128x256xf32>
    %cst_9 = arith.constant dense<0xFF800000> : vector<256xf32>
    %8 = vector.multi_reduction <maximumf>, %7, %cst_9 [0] : vector<128x256xf32> to vector<256xf32>
    %9 = vector.shape_cast %8 : vector<256xf32> to vector<1x256xf32>
    %10 = vector.broadcast %9 : vector<1x256xf32> to vector<128x256xf32>
    %11 = arith.cmpf oeq, %7, %10 : vector<128x256xf32>
    %c128_i32 = arith.constant 128 : i32
    %12 = vector.broadcast %c128_i32 : i32 to vector<128x256xi32>
    %13 = arith.select %11, %0, %12 : vector<128x256xi1>, vector<128x256xi32>
    %cst_10 = arith.constant dense<2147483647> : vector<256xi32>
    %14 = vector.multi_reduction <minsi>, %13, %cst_10 [0] : vector<128x256xi32> to vector<256xi32>
    %15 = vector.shape_cast %14 : vector<256xi32> to vector<1x256xi32>
    %16 = vector.broadcast %15 : vector<1x256xi32> to vector<128x256xi32>
    %17 = arith.cmpi eq, %0, %16 : vector<128x256xi32>
    %18 = arith.extui %17 : vector<128x256xi1> to vector<128x256xi32>
    %19 = arith.sitofp %18 : vector<128x256xi32> to vector<128x256xf32>
    %cst_11 = arith.constant dense<0.000000e+00> : vector<32x256xf32>
    %20 = tpu.matmul %6, %19, %cst_11 {dimension_numbers = #tpu.dot_dimension_numbers<[1], [0], [0], [1], [0, 0, 1, 1], [], []>} : vector<32x128xf32>, vector<128x256xf32>, vector<32x256xf32> -> vector<32x256xf32>
    %c0_12 = arith.constant 0 : index
    %c0_13 = arith.constant 0 : index
    %c0_14 = arith.constant 0 : index
    %c0_15 = arith.constant 0 : index
    %21 = vector.load %arg5[%c0_12, %c0_13, %c0_14, %c0_15] : memref<1x1x32x256xf32, #tpu.memory_space<vmem>>, vector<1x1x32x256xf32>
    %22 = vector.shape_cast %21 : vector<1x1x32x256xf32> to vector<32x256xf32>
    %23 = vector.shape_cast %20 : vector<32x256xf32> to vector<1x1x32x256xf32>
    tpu.vector_store %arg5[%c0_12, %c0_13, %c0_14, %c0_15], %23 {strides = array<i32>} : memref<1x1x32x256xf32, #tpu.memory_space<vmem>>, vector<1x1x32x256xf32>,
    %24 = vector.shape_cast %15 : vector<1x256xi32> to vector<256xi32>
    %c0_16 = arith.constant 0 : index
    %c0_17 = arith.constant 0 : index
    %c0_18 = arith.constant 0 : index
    %25 = vector.load %arg6[%c0_16, %c0_17, %c0_18] : memref<1x1x256xi32, #tpu.memory_space<vmem>>, vector<1x1x256xi32>
    %26 = vector.shape_cast %25 : vector<1x1x256xi32> to vector<256xi32>
    %27 = vector.shape_cast %24 : vector<256xi32> to vector<1x1x256xi32>
    tpu.vector_store %arg6[%c0_16, %c0_17, %c0_18], %27 {strides = array<i32>} : memref<1x1x256xi32, #tpu.memory_space<vmem>>, vector<1x1x256xi32>,
    return
  }
  func.func @transform_0(%arg0: i32, %arg1: i32) -> (i32, i32, i32, i32) {
    %c0_i32 = arith.constant 0 : i32
    %c0_i32_0 = arith.constant 0 : i32
    %c0_i32_1 = arith.constant 0 : i32
    return %arg0, %c0_i32, %c0_i32_0, %arg1 : i32, i32, i32, i32
  }
  func.func @transform_1(%arg0: i32, %arg1: i32) -> (i32, i32, i32) {
    %c0_i32 = arith.constant 0 : i32
    %c0_i32_0 = arith.constant 0 : i32
    %c0_i32_1 = arith.constant 0 : i32
    %c0_i32_2 = arith.constant 0 : i32
    return %c0_i32, %c0_i32_0, %c0_i32_1 : i32, i32, i32
  }
  func.func @transform_2(%arg0: i32, %arg1: i32) -> (i32, i32, i32) {
    %c0_i32 = arith.constant 0 : i32
    %c0_i32_0 = arith.constant 0 : i32
    %c0_i32_1 = arith.constant 0 : i32
    %c0_i32_2 = arith.constant 0 : i32
    return %c0_i32, %c0_i32_0, %c0_i32_1 : i32, i32, i32
  }
  func.func @transform_3(%arg0: i32, %arg1: i32) -> (i32, i32, i32, i32) {
    %c0_i32 = arith.constant 0 : i32
    %c0_i32_0 = arith.constant 0 : i32
    %c0_i32_1 = arith.constant 0 : i32
    return %arg0, %c0_i32, %c0_i32_0, %arg1 : i32, i32, i32, i32
  }
  func.func @transform_4(%arg0: i32, %arg1: i32) -> (i32, i32, i32) {
    %c0_i32 = arith.constant 0 : i32
    %c0_i32_0 = arith.constant 0 : i32
    return %arg0, %c0_i32, %arg1 : i32, i32, i32
  }
}

</mosaic_0001>

<llo_original>
// kernel: tpu_custom_call.1
$region0: #{tpu_custom_call.1}
  #allocation0 [shape = 'u32[]', space=smem, size = 0x4, offset = 0x4, fixed_abs, tag = 'smem constant byte address 0x4 - core index']
  #allocation1 [shape = 'u32[144,128]{1,0:T(1,128)}', space=vmem, size = 0x12000, scoped, tag = 'internal scratch']
  %s0 = inlined_call_operand.hbm [shape: f32[2,1,32,256], index: 0, kind: input, shape index: {}]
  %s1 = inlined_call_operand.hbm [shape: f32[1,128,32], index: 1, kind: input, shape index: {}]
  %s2 = inlined_call_operand.hbm [shape: f32[1,32,128], index: 2, kind: input, shape index: {}]
  %s3 = inlined_call_operand.hbm [shape: f32[2,1,32,256], index: 3, kind: output, shape index: {0}]
  %s4 = inlined_call_operand.hbm [shape: s32[2,1,256], index: 4, kind: output, shape index: {1}]
  %5 = xla_tuple %s3, %s4
  %s6 = sld [smem:[#allocation0]]
  $region65: #{tpu_custom_call.1} parent=0
    _
  %s8 = ssub.s32 1, %s6
  %s9 = scalar_select 0, %s8, %s6
  $region1: #{tpu_custom_call.1} parent=0
    #allocation2 [shape = 'u8[65536]{0}', space=vmem, size = 0x10000, scoped, tag = 'input window, operand 0']
    #allocation3 [shape = 's32[2]{0}', space=sflag, size = 0x8, scoped, tag = 'scoped memory for tpu_custom_call.1']
    #allocation4 [shape = 's32[2]{0}', space=sflag, size = 0x8, scoped, tag = 'scoped memory for tpu_custom_call.1']
    #allocation5 [shape = 'u8[65536]{0}', space=vmem, size = 0x10000, scoped, tag = 'input window, operand 1, single buffered']
    #allocation6 [shape = 's32[1]{0}', space=sflag, size = 0x4, scoped, tag = 'scoped memory for tpu_custom_call.1']
    #allocation7 [shape = 'u8[16384]{0}', space=vmem, size = 0x4000, scoped, tag = 'input window, operand 2, single buffered']
    #allocation8 [shape = 'u8[65536]{0}', space=vmem, size = 0x10000, scoped, tag = 'output window, operand 0']
    #allocation9 [shape = 'u8[2048]{0}', space=vmem, size = 0x800, scoped, tag = 'output window, operand 1']
    #allocation10 [shape = 's32[2]{0}', space=sflag, size = 0x8, scoped, tag = 'scoped memory for tpu_custom_call.1']
    %10 = vsyncpa [#allocation3], 0
    %s11 = scalar_lea.sflag [#allocation3], 1
    %12 = vsyncpa %s11, 0
    %13 = vsyncpa [#allocation6], 0
    %14 = vsyncpa [#allocation4], 0
    %s15 = scalar_lea.sflag [#allocation4], 1
    %16 = vsyncpa %s15, 0
    %17 = vsyncpa [#allocation10], 0
    %s18 = scalar_lea.sflag [#allocation10], 1
    %19 = vsyncpa %s18, 0
    loop: start=0, step=1, limit=4
    $region2: #{tpu_custom_call.1} parent=1 // loop_pre_header
      _
    $region3: #{tpu_custom_call.1} parent=1 // loop_header
      %s21 = sphi 0, %s25
      %p22 = scmp.ge.s32.totalorder %s21, 4
      %s28 = sphi 0, %s40
      %s29 = sphi 0, %s36
      %s30 = sphi 0, %s28
      %s31 = sphi 0, %s29
      %s32 = sphi 0, %s30
      %s33 = sphi 0, %s31
      %s45 = sphi 0, %s47
      %s48 = sphi 0, %s45
      %s49 = sphi 0, %s48
      %s65 = sphi 0, %s49
      %s69 = sphi 0, %s69
      %s71 = sphi 0, %s69
      %s72 = sphi 0, %s71
      %s86 = sphi 0, %s72
      %s90 = sphi 0, %s90
      %s92 = sphi 0, %s90
      %s93 = sphi 0, %s92
      %s107 = sphi 0, %s93
      %s115 = sphi 0, %s117
      %s118 = sphi 0, %s115
      %s119 = sphi 0, %s118
      %s135 = sphi 0, %s119
      %s143 = sphi 0, %s145
      %s146 = sphi 0, %s143
      %s147 = sphi 0, %s146
      %s163 = sphi 0, %s147
    $region4: #{tpu_custom_call.1} parent=1 // loop_header_branch
      %24 = sbr.rel (%p22) target = $region8
    $region5: #{tpu_custom_call.1} parent=1 // loop_body
      %s26 = ssub.s32 %s21, 1
      %s27 = ssub.s32 %s21, 2
      %s34 = sadd.s32 1, %s29
      %p35 = scmp.ge.s32.totalorder %s34, 1
      %s36 = scalar_select %p35, 0, %s34
      %s37 = sadd.s32 1, %s28
      %s38 = scalar_select %p35, %s37, %s28
      %p39 = scmp.ge.s32.totalorder %s38, 2
      %s40 = scalar_select %p39, 0, %s38
      %s41 = ssub.s32 %s28, %s40
      %s42 = ssub.s32 %s29, %s36
      %s43 = sor.u32 %s41, %s42
      %p44 = scmp.eq.s32.totalorder %s43, 0
      %s46 = sadd.s32 %s45, 1
      %s47 = scalar_select %p44, %s45, %s46
      %p50 = pneg %p44
      %p51 = scmp.eq.s32.totalorder %s21, 1
      %p52 = por %p50, %p51
      %p53 = scmp.ne.s32.totalorder %s45, %s48
      %p54 = scmp.eq.s32.totalorder %s21, 0
      %p55 = por %p53, %p54
      %p56 = scmp.ne.s32.totalorder %s45, %s48
      %p57 = scmp.eq.s32.totalorder %s26, 1
      %p58 = por %p56, %p57
      %p59 = scmp.ne.s32.totalorder %s48, %s49
      %p60 = scmp.eq.s32.totalorder %s26, 0
      %p61 = por %p59, %p60
      %p62 = scmp.ne.s32.totalorder %s48, %s49
      %p63 = scmp.eq.s32.totalorder %s27, 1
      %p64 = por %p62, %p63
      %p66 = scmp.ne.s32.totalorder %s49, %s65
      %p67 = scmp.eq.s32.totalorder %s27, 0
      %p68 = por %p66, %p67
      %s70 = sadd.s32 %s69, 1
      %p73 = scmp.eq.s32.totalorder %s21, 1
      %p74 = scmp.ne.s32.totalorder %s69, %s71
      %p75 = scmp.eq.s32.totalorder %s21, 0
      %p76 = por %p74, %p75
      %p77 = scmp.ne.s32.totalorder %s69, %s71
      %p78 = scmp.eq.s32.totalorder %s26, 1
      %p79 = por %p77, %p78
      %p80 = scmp.ne.s32.totalorder %s71, %s72
      %p81 = scmp.eq.s32.totalorder %s26, 0
      %p82 = por %p80, %p81
      %p83 = scmp.ne.s32.totalorder %s71, %s72
      %p84 = scmp.eq.s32.totalorder %s27, 1
      %p85 = por %p83, %p84
      %p87 = scmp.ne.s32.totalorder %s72, %s86
      %p88 = scmp.eq.s32.totalorder %s27, 0
      %p89 = por %p87, %p88
      %s91 = sadd.s32 %s90, 1
      %p94 = scmp.eq.s32.totalorder %s21, 1
      %p95 = scmp.ne.s32.totalorder %s90, %s92
      %p96 = scmp.eq.s32.totalorder %s21, 0
      %p97 = por %p95, %p96
      %p98 = scmp.ne.s32.totalorder %s90, %s92
      %p99 = scmp.eq.s32.totalorder %s26, 1
      %p100 = por %p98, %p99
      %p101 = scmp.ne.s32.totalorder %s92, %s93
      %p102 = scmp.eq.s32.totalorder %s26, 0
      %p103 = por %p101, %p102
      %p104 = scmp.ne.s32.totalorder %s92, %s93
      %p105 = scmp.eq.s32.totalorder %s27, 1
      %p106 = por %p104, %p105
      %p108 = scmp.ne.s32.totalorder %s93, %s107
      %p109 = scmp.eq.s32.totalorder %s27, 0
      %p110 = por %p108, %p109
      %s111 = ssub.s32 %s28, %s40
      %s112 = ssub.s32 %s29, %s36
      %s113 = sor.u32 %s111, %s112
      %p114 = scmp.eq.s32.totalorder %s113, 0
      %s116 = sadd.s32 %s115, 1
      %s117 = scalar_select %p114, %s115, %s116
      %p120 = pneg %p114
      %p121 = scmp.eq.s32.totalorder %s21, 1
      %p122 = por %p120, %p121
      %p123 = scmp.ne.s32.totalorder %s115, %s118
      %p124 = scmp.eq.s32.totalorder %s21, 0
      %p125 = por %p123, %p124
      %p126 = scmp.ne.s32.totalorder %s115, %s118
      %p127 = scmp.eq.s32.totalorder %s26, 1
      %p128 = por %p126, %p127
      %p129 = scmp.ne.s32.totalorder %s118, %s119
      %p130 = scmp.eq.s32.totalorder %s26, 0
      %p131 = por %p129, %p130
      %p132 = scmp.ne.s32.totalorder %s118, %s119
      %p133 = scmp.eq.s32.totalorder %s27, 1
      %p134 = por %p132, %p133
      %p136 = scmp.ne.s32.totalorder %s119, %s135
      %p137 = scmp.eq.s32.totalorder %s27, 0
      %p138 = por %p136, %p137
      %s139 = ssub.s32 %s28, %s40
      %s140 = ssub.s32 %s29, %s36
      %s141 = sor.u32 %s139, %s140
      %p142 = scmp.eq.s32.totalorder %s141, 0
      %s144 = sadd.s32 %s143, 1
      %s145 = scalar_select %p142, %s143, %s144
      %p148 = pneg %p142
      %p149 = scmp.eq.s32.totalorder %s21, 1
      %p150 = por %p148, %p149
      %p151 = scmp.ne.s32.totalorder %s143, %s146
      %p152 = scmp.eq.s32.totalorder %s21, 0
      %p153 = por %p151, %p152
      %p154 = scmp.ne.s32.totalorder %s143, %s146
      %p155 = scmp.eq.s32.totalorder %s26, 1
      %p156 = por %p154, %p155
      %p157 = scmp.ne.s32.totalorder %s146, %s147
      %p158 = scmp.eq.s32.totalorder %s26, 0
      %p159 = por %p157, %p158
      %p160 = scmp.ne.s32.totalorder %s146, %s147
      %p161 = scmp.eq.s32.totalorder %s27, 1
      %p162 = por %p160, %p161
      %p164 = scmp.ne.s32.totalorder %s147, %s163
      %p165 = scmp.eq.s32.totalorder %s27, 0
      %p166 = por %p164, %p165
      %p167 = scmp.le.s32.totalorder 1, %s21
      %p168 = scmp.lt.s32.totalorder %s21, 3
      %p169 = pnand %p167, %p168
      %p170 = pneg %p169
      // Predicated region
      $region9: #{tpu_custom_call.1} parent=5 // pred_check
        _
      $region10: #{tpu_custom_call.1} parent=5 // pred_check_branch
        %172 = sbr.rel (%p169) target = $region12
      $region11: #{tpu_custom_call.1} parent=5 // pred_region
        %s173 = ssub.s32 %s21, 1
        // Predicated region
        $region13: #{tpu_custom_call.1} parent=11 // pred_check
          %p174 = pneg %p82
        $region14: #{tpu_custom_call.1} parent=11 // pred_check_branch
          %176 = sbr.rel (%p174) target = $region16
        $region15: #{tpu_custom_call.1} parent=11 // pred_region
          %s178 = ssub.s32 2048, 2048
          %179 = vsyncadd [#allocation6], %s178
          %s180 = sshll.u32 [#allocation5], 4
          %s181 = int_to_ptr.vmem [resolvable:$true] %s180
          %186 = dma.hbm_to_vmem [thread:$0]  %s1, 2048, %s181, [#allocation6], 128, 128, 8
        $region16: #{tpu_custom_call.1} parent=11 // pred_fallthru
          _
        // Predicated region
        $region17: #{tpu_custom_call.1} parent=11 // pred_check
          %p187 = pneg %p103
        $region18: #{tpu_custom_call.1} parent=11 // pred_check_branch
          %189 = sbr.rel (%p187) target = $region20
        $region19: #{tpu_custom_call.1} parent=11 // pred_region
          %s191 = ssub.s32 512, 512
          %192 = vsyncadd [#allocation6], %s191
          %s193 = sshll.u32 [#allocation7], 4
          %s194 = int_to_ptr.vmem [resolvable:$true] %s193
          %199 = dma.hbm_to_vmem [thread:$0]  %s2, 512, %s194, [#allocation6], 128, 128, 8
        $region20: #{tpu_custom_call.1} parent=11 // pred_fallthru
          _
      $region12: #{tpu_custom_call.1} parent=5 // pred_fallthru
        _
      %p200 = scmp.lt.s32.totalorder %s21, 2
      // Predicated region
      $region21: #{tpu_custom_call.1} parent=5 // pred_check
        %p201 = pneg %p200
      $region22: #{tpu_custom_call.1} parent=5 // pred_check_branch
        %203 = sbr.rel (%p201) target = $region24
      $region23: #{tpu_custom_call.1} parent=5 // pred_region
        // Predicated region
        $region25: #{tpu_custom_call.1} parent=23 // pred_check
          %p204 = pneg %p55
        $region26: #{tpu_custom_call.1} parent=23 // pred_check_branch
          %206 = sbr.rel (%p204) target = $region28
        $region27: #{tpu_custom_call.1} parent=23 // pred_region
          %s207 = sand.u32 %s45, 1
          %s208 = scalar_lea.sflag [#allocation3], %s207
          %s209 = sand.u32 %s45, 1
          %s210 = smul.addr %s209, 64
          %s211 = scalar_lea.vmem [#allocation2], %s210
          %s212 = smul.u32 2, %s29
          %s214 = ssub.s32 1024, 1024
          %215 = vsyncadd %s208, %s214
          %s216 = smul.addr %s28, 8
          %s217 = sadd.s32 %s212, %s216
          %s218 = smul.addr %s217, 128
          %s219 = scalar_lea.hbm %s0, %s218
          %s220 = sshll.u32 %s211, 4
          %s221 = int_to_ptr.vmem [resolvable:$true] %s220
          %226 = dma.hbm_to_vmem [thread:$0]  %s219, 1024, %s221, %s208, 256, 256, 16
        $region28: #{tpu_custom_call.1} parent=23 // pred_fallthru
          _
      $region24: #{tpu_custom_call.1} parent=5 // pred_fallthru
        _
      %p227 = scmp.le.s32.totalorder 1, %s21
      %p228 = scmp.lt.s32.totalorder %s21, 3
      %p229 = pnand %p227, %p228
      %p230 = pneg %p229
      // Predicated region
      $region29: #{tpu_custom_call.1} parent=5 // pred_check
        _
      $region30: #{tpu_custom_call.1} parent=5 // pred_check_branch
        %232 = sbr.rel (%p229) target = $region32
      $region31: #{tpu_custom_call.1} parent=5 // pred_region
        %s233 = ssub.s32 %s21, 1
        %s234 = sand.u32 %s48, 1
        %s235 = scalar_lea.sflag [#allocation3], %s234
        %s236 = sand.u32 %s48, 1
        %s237 = smul.addr %s236, 64
        %s238 = scalar_lea.vmem [#allocation2], %s237
        // Predicated region
        $region33: #{tpu_custom_call.1} parent=31 // pred_check
          %p239 = pneg %p61
        $region34: #{tpu_custom_call.1} parent=31 // pred_check_branch
          %241 = sbr.rel (%p239) target = $region36
        $region35: #{tpu_custom_call.1} parent=31 // pred_region
          %242 = dma.done %s235, 1024
        $region36: #{tpu_custom_call.1} parent=31 // pred_fallthru
          _
        // Predicated region
        $region37: #{tpu_custom_call.1} parent=31 // pred_check
          %p243 = pneg %p82
        $region38: #{tpu_custom_call.1} parent=31 // pred_check_branch
          %245 = sbr.rel (%p243) target = $region40
        $region39: #{tpu_custom_call.1} parent=31 // pred_region
          %246 = dma.done [#allocation6], 2048
        $region40: #{tpu_custom_call.1} parent=31 // pred_fallthru
          _
        // Predicated region
        $region41: #{tpu_custom_call.1} parent=31 // pred_check
          %p247 = pneg %p103
        $region42: #{tpu_custom_call.1} parent=31 // pred_check_branch
          %249 = sbr.rel (%p247) target = $region44
        $region43: #{tpu_custom_call.1} parent=31 // pred_region
          %250 = dma.done [#allocation6], 512
        $region44: #{tpu_custom_call.1} parent=31 // pred_fallthru
          _
        %s251 = sand.u32 %s48, 1
        %s252 = scalar_lea.sflag [#allocation3], %s251
        %s253 = sand.u32 %s48, 1
        %s254 = smul.addr %s253, 64
        %s255 = scalar_lea.vmem [#allocation2], %s254
        %p256 = pneg %p61
        %p257 = pneg %p58
        %p258 = pneg %p82
        %p259 = pneg %p79
        %p260 = pneg %p103
        %p261 = pneg %p100
        %p262 = pneg %p131
        %p263 = pneg %p128
        %s264 = sand.u32 %s118, 1
        %s265 = scalar_lea.sflag [#allocation4], %s264
        %s266 = sand.u32 %s118, 1
        %s267 = smul.addr %s266, 64
        %s268 = scalar_lea.vmem [#allocation8], %s267
        %p269 = pneg %p159
        %p270 = pneg %p156
        %s271 = sand.u32 %s146, 1
        %s272 = scalar_lea.sflag [#allocation10], %s271
        %s273 = sand.u32 %s146, 1
        %s274 = smul.addr %s273, 2
        %s275 = scalar_lea.vmem [#allocation9], %s274
        %s276 = smul.u32 2, %s31
        %s277 = smul.u32 2, %s31
        %s278 = smul.u32 2, %s31
        %v279 = vlaneseq
        %v280 = vshrl.u32 %v279, 7
        %v281 = vadd.s32 %v280, 8
        %v282 = vadd.s32 %v280, 16
        %v283 = vadd.s32 %v280, 24
        %v284 = vadd.s32 %v280, 32
        %v285 = vadd.s32 %v280, 40
        %v286 = vadd.s32 %v280, 48
        %v287 = vadd.s32 %v280, 56
        %v288 = vadd.s32 %v280, 64
        %v289 = vadd.s32 %v280, 72
        %v290 = vadd.s32 %v280, 80
        %v291 = vadd.s32 %v280, 88
        %v292 = vadd.s32 %v280, 96
        %v293 = vadd.s32 %v280, 104
        %v294 = vadd.s32 %v280, 112
        %v295 = vadd.s32 %v280, 120
        %v296 = vld [vmem:[%s238] sm:$0xff]
        %v297 = vld [vmem:[%s238 + $0x8] sm:$0xff]
        %v298 = vld [vmem:[%s238 + $0x10] sm:$0xff]
        %v299 = vld [vmem:[%s238 + $0x18] sm:$0xff]
        %v300 = vld [vmem:[%s238 + $0x20] sm:$0xff]
        %v301 = vld [vmem:[%s238 + $0x28] sm:$0xff]
        %v302 = vld [vmem:[%s238 + $0x30] sm:$0xff]
        %v303 = vld [vmem:[%s238 + $0x38] sm:$0xff]
        %v304 = vld [vmem:[#allocation5] sm:$0xff]
        %v305 = vld [vmem:[#allocation5 + $0x8] sm:$0xff]
        %v306 = vld [vmem:[#allocation5 + $0x10] sm:$0xff]
        %v307 = vld [vmem:[#allocation5 + $0x18] sm:$0xff]
        %v308 = vld [vmem:[#allocation5 + $0x20] sm:$0xff]
        %v309 = vld [vmem:[#allocation5 + $0x28] sm:$0xff]
        %v310 = vld [vmem:[#allocation5 + $0x30] sm:$0xff]
        %v311 = vld [vmem:[#allocation5 + $0x38] sm:$0xff]
        %v312 = vld [vmem:[#allocation5 + $0x40] sm:$0xff]
        %v313 = vld [vmem:[#allocation5 + $0x48] sm:$0xff]
        %v314 = vld [vmem:[#allocation5 + $0x50] sm:$0xff]
        %v315 = vld [vmem:[#allocation5 + $0x58] sm:$0xff]
        %v316 = vld [vmem:[#allocation5 + $0x60] sm:$0xff]
        %v317 = vld [vmem:[#allocation5 + $0x68] sm:$0xff]
        %v318 = vld [vmem:[#allocation5 + $0x70] sm:$0xff]
        %v319 = vld [vmem:[#allocation5 + $0x78] sm:$0xff]
        %v320 = vld [vmem:[#allocation7] sm:$0xff]
        %v321 = vld [vmem:[#allocation7 + $0x8] sm:$0xff]
        %v322 = vld [vmem:[#allocation7 + $0x10] sm:$0xff]
        %v323 = vld [vmem:[#allocation7 + $0x18] sm:$0xff]
        %vm324 = vcmask 261120
        %v326 = vsel %vm324, %v304, 0
        %v329 = vsel %vm324, %v305, 0
        %v332 = vsel %vm324, %v306, 0
        %v335 = vsel %vm324, %v307, 0
        %v338 = vsel %vm324, %v308, 0
        %v341 = vsel %vm324, %v309, 0
        %v344 = vsel %vm324, %v310, 0
        %v347 = vsel %vm324, %v311, 0
        %v350 = vsel %vm324, %v312, 0
        %v353 = vsel %vm324, %v313, 0
        %v356 = vsel %vm324, %v314, 0
        %v359 = vsel %vm324, %v315, 0
        %v362 = vsel %vm324, %v316, 0
        %v365 = vsel %vm324, %v317, 0
        %v368 = vsel %vm324, %v318, 0
        %v371 = vsel %vm324, %v319, 0
        %373 = vmatprep.subr.mxu0 %v297
        %374 = vmatpush1.msra.mxu0 %v296
        %375 = vmatprep.subr.mxu0 %v299
        %376 = vmatpush1.msra.mxu0 %v298
        %377 = vmatprep.subr.mxu0 %v301
        %378 = vmatpush1.msra.mxu0 %v300
        %379 = vmatprep.subr.mxu0 %v303
        %380 = vmatpush1.msra.mxu0 %v302
        %381 = vmatprep.subr.mxu0 0.0
        %382 = vmatpush1.msra.mxu0 0.0
        %383 = vmatprep.subr.mxu0 0.0
        %384 = vmatpush1.msra.mxu0 0.0
        %385 = vmatprep.subr.mxu0 0.0
        %386 = vmatpush1.msra.mxu0 0.0
        %387 = vmatprep.subr.mxu0 0.0
        %388 = vmatpush1.msra.mxu0 0.0
        %389 = vmatprep.subr.mxu0 0.0
        %390 = vmatpush1.msra.mxu0 0.0
        %391 = vmatprep.subr.mxu0 0.0
        %392 = vmatpush1.msra.mxu0 0.0
        %393 = vmatprep.subr.mxu0 0.0
        %394 = vmatpush1.msra.mxu0 0.0
        %395 = vmatprep.subr.mxu0 0.0
        %396 = vmatpush1.msra.mxu0 0.0
        %397 = vmatprep.subr.mxu0 0.0
        %398 = vmatpush1.msra.mxu0 0.0
        %399 = vmatprep.subr.mxu0 0.0
        %400 = vmatpush1.msra.mxu0 0.0
        %401 = vmatprep.subr.mxu0 0.0
        %402 = vmatpush1.msra.mxu0 0.0
        %403 = vmatprep.subr.mxu0 0.0
        %404 = vmatpush1.msra.mxu0 0.0
        %405 = vmatprep.subr.mxu0 0.0
        %406 = vmatpush1.msra.mxu0 0.0
        %407 = vmatprep.subr.mxu0 0.0
        %408 = vmatpush1.msra.mxu0 0.0
        %409 = vmatprep.subr.mxu0 0.0
        %410 = vmatpush1.msra.mxu0 0.0
        %411 = vmatprep.subr.mxu0 0.0
        %412 = vmatpush1.msra.mxu0 0.0
        %413 = vmatprep.subr.mxu0 0.0
        %414 = vmatpush1.msra.mxu0 0.0
        %415 = vmatprep.subr.mxu0 0.0
        %416 = vmatpush1.msra.mxu0 0.0
        %417 = vmatprep.subr.mxu0 0.0
        %418 = vmatpush1.msra.mxu0 0.0
        %419 = vmatprep.subr.mxu0 0.0
        %420 = vmatpush1.msra.mxu0 0.0
        %421 = vmatprep.subr.mxu0 0.0
        %422 = vmatpush1.msra.mxu0 0.0
        %423 = vmatprep.subr.mxu0 0.0
        %424 = vmatpush1.msra.mxu0 0.0
        %425 = vmatprep.subr.mxu0 0.0
        %426 = vmatpush1.msra.mxu0 0.0
        %427 = vmatprep.subr.mxu0 0.0
        %428 = vmatpush1.msra.mxu0 0.0
        %429 = vmatprep.subr.mxu0 0.0
        %430 = vmatpush1.msra.mxu0 0.0
        %431 = vmatprep.subr.mxu0 0.0
        %432 = vmatpush1.msra.mxu0 0.0
        %433 = vmatprep.subr.mxu0 0.0
        %434 = vmatpush1.msra.mxu0 0.0
        %435 = vmatprep.subr.mxu0 0.0
        %436 = vmatpush1.msra.mxu0 0.0
        %437 = vmatprep.mubr.f32.mxu0 0.0
        %438 = vmatmul.mubr.f32.gmra.mrb[0].mxu0 %v326
        %v439 = vpop.f32.mrb[0].mxu0
        %v440 = vadd.f32 0.0, %v439
        %v441 = vpop.f32.mrb[0].mxu0
        %v442 = vadd.f32 0.0, %v441
        %443 = vmatprep.mubr.f32.mxu0 0.0
        %444 = vmatmul.mubr.f32.gmra.mrb[0].mxu0 %v329
        %v445 = vpop.f32.mrb[0].mxu0
        %v446 = vadd.f32 0.0, %v445
        %v447 = vpop.f32.mrb[0].mxu0
        %v448 = vadd.f32 0.0, %v447
        %449 = vmatprep.mubr.f32.mxu0 0.0
        %450 = vmatmul.mubr.f32.gmra.mrb[0].mxu0 %v332
        %v451 = vpop.f32.mrb[0].mxu0
        %v452 = vadd.f32 0.0, %v451
        %v453 = vpop.f32.mrb[0].mxu0
        %v454 = vadd.f32 0.0, %v453
        %455 = vmatprep.mubr.f32.mxu0 0.0
        %456 = vmatmul.mubr.f32.gmra.mrb[0].mxu0 %v335
        %v457 = vpop.f32.mrb[0].mxu0
        %v458 = vadd.f32 0.0, %v457
        %v459 = vpop.f32.mrb[0].mxu0
        %v460 = vadd.f32 0.0, %v459
        %461 = vmatprep.mubr.f32.mxu0 0.0
        %462 = vmatmul.mubr.f32.gmra.mrb[0].mxu0 %v338
        %v463 = vpop.f32.mrb[0].mxu0
        %v464 = vadd.f32 0.0, %v463
        %v465 = vpop.f32.mrb[0].mxu0
        %v466 = vadd.f32 0.0, %v465
        %467 = vmatprep.mubr.f32.mxu0 0.0
        %468 = vmatmul.mubr.f32.gmra.mrb[0].mxu0 %v341
        %v469 = vpop.f32.mrb[0].mxu0
        %v470 = vadd.f32 0.0, %v469
        %v471 = vpop.f32.mrb[0].mxu0
        %v472 = vadd.f32 0.0, %v471
        %473 = vmatprep.mubr.f32.mxu0 0.0
        %474 = vmatmul.mubr.f32.gmra.mrb[0].mxu0 %v344
        %v475 = vpop.f32.mrb[0].mxu0
        %v476 = vadd.f32 0.0, %v475
        %v477 = vpop.f32.mrb[0].mxu0
        %v478 = vadd.f32 0.0, %v477
        %479 = vmatprep.mubr.f32.mxu0 0.0
        %480 = vmatmul.mubr.f32.gmra.mrb[0].mxu0 %v347
        %v481 = vpop.f32.mrb[0].mxu0
        %v482 = vadd.f32 0.0, %v481
        %v483 = vpop.f32.mrb[0].mxu0
        %v484 = vadd.f32 0.0, %v483
        %485 = vmatprep.mubr.f32.mxu0 0.0
        %486 = vmatmul.mubr.f32.gmra.mrb[0].mxu0 %v350
        %v487 = vpop.f32.mrb[0].mxu0
        %v488 = vadd.f32 0.0, %v487
        %v489 = vpop.f32.mrb[0].mxu0
        %v490 = vadd.f32 0.0, %v489
        %491 = vmatprep.mubr.f32.mxu0 0.0
        %492 = vmatmul.mubr.f32.gmra.mrb[0].mxu0 %v353
        %v493 = vpop.f32.mrb[0].mxu0
        %v494 = vadd.f32 0.0, %v493
        %v495 = vpop.f32.mrb[0].mxu0
        %v496 = vadd.f32 0.0, %v495
        %497 = vmatprep.mubr.f32.mxu0 0.0
        %498 = vmatmul.mubr.f32.gmra.mrb[0].mxu0 %v356
        %v499 = vpop.f32.mrb[0].mxu0
        %v500 = vadd.f32 0.0, %v499
        %v501 = vpop.f32.mrb[0].mxu0
        %v502 = vadd.f32 0.0, %v501
        %503 = vmatprep.mubr.f32.mxu0 0.0
        %504 = vmatmul.mubr.f32.gmra.mrb[0].mxu0 %v359
        %v505 = vpop.f32.mrb[0].mxu0
        %v506 = vadd.f32 0.0, %v505
        %v507 = vpop.f32.mrb[0].mxu0
        %v508 = vadd.f32 0.0, %v507
        %509 = vmatprep.mubr.f32.mxu0 0.0
        %510 = vmatmul.mubr.f32.gmra.mrb[0].mxu0 %v362
        %v511 = vpop.f32.mrb[0].mxu0
        %v512 = vadd.f32 0.0, %v511
        %v513 = vpop.f32.mrb[0].mxu0
        %v514 = vadd.f32 0.0, %v513
        %515 = vmatprep.mubr.f32.mxu0 0.0
        %516 = vmatmul.mubr.f32.gmra.mrb[0].mxu0 %v365
        %v517 = vpop.f32.mrb[0].mxu0
        %v518 = vadd.f32 0.0, %v517
        %v519 = vpop.f32.mrb[0].mxu0
        %v520 = vadd.f32 0.0, %v519
        %521 = vmatprep.mubr.f32.mxu0 0.0
        %522 = vmatmul.mubr.f32.gmra.mrb[0].mxu0 %v368
        %v523 = vpop.f32.mrb[0].mxu0
        %v524 = vadd.f32 0.0, %v523
        %v525 = vpop.f32.mrb[0].mxu0
        %v526 = vadd.f32 0.0, %v525
        %527 = vmatprep.mubr.f32.mxu0 0.0
        %528 = vmatmul.mubr.f32.gmra.mrb[0].mxu0 %v371
        %v529 = vpop.f32.mrb[0].mxu0
        %v530 = vadd.f32 0.0, %v529
        %v531 = vpop.f32.mrb[0].mxu0
        %v532 = vadd.f32 0.0, %v531
        %533 = vdwg.mxu0
        %v534 = vmax.f32 %v440, %v452
        %v535 = vmax.f32 %v446, %v458
        %v536 = vmax.f32 %v534, %v464
        %v537 = vmax.f32 %v535, %v470
        %v538 = vmax.f32 %v536, %v476
        %v539 = vmax.f32 %v537, %v482
        %v540 = vmax.f32 %v538, %v488
        %v541 = vmax.f32 %v539, %v494
        %v542 = vmax.f32 %v540, %v500
        %v543 = vmax.f32 %v541, %v506
        %v544 = vmax.f32 %v542, %v512
        %v545 = vmax.f32 %v543, %v518
        %v546 = vmax.f32 %v544, %v524
        %v547 = vmax.f32 %v545, %v530
        %v548 = vmax.f32 %v546, %v547
        %v549 = vrot.slane %v548, 4
        %v550 = vmax.f32 %v548, %v549
        %v551 = vrot.slane %v550, 2
        %v552 = vmax.f32 %v550, %v551
        %v553 = vrot.slane %v552, 1
        %v554 = vmax.f32 %v552, %v553
        %v555 = vmax.f32 %v442, %v454
        %v556 = vmax.f32 %v448, %v460
        %v557 = vmax.f32 %v555, %v466
        %v558 = vmax.f32 %v556, %v472
        %v559 = vmax.f32 %v557, %v478
        %v560 = vmax.f32 %v558, %v484
        %v561 = vmax.f32 %v559, %v490
        %v562 = vmax.f32 %v560, %v496
        %v563 = vmax.f32 %v561, %v502
        %v564 = vmax.f32 %v562, %v508
        %v565 = vmax.f32 %v563, %v514
        %v566 = vmax.f32 %v564, %v520
        %v567 = vmax.f32 %v565, %v526
        %v568 = vmax.f32 %v566, %v532
        %v569 = vmax.f32 %v567, %v568
        %v570 = vrot.slane %v569, 4
        %v571 = vmax.f32 %v569, %v570
        %v572 = vrot.slane %v571, 2
        %v573 = vmax.f32 %v571, %v572
        %v574 = vrot.slane %v573, 1
        %v575 = vmax.f32 %v573, %v574
        %vm576 = vcmp.eq.f32.partialorder %v440, %v554
        %vm577 = vcmp.eq.f32.partialorder %v442, %v575
        %vm578 = vcmp.eq.f32.partialorder %v446, %v554
        %vm579 = vcmp.eq.f32.partialorder %v448, %v575
        %vm580 = vcmp.eq.f32.partialorder %v452, %v554
        %vm581 = vcmp.eq.f32.partialorder %v454, %v575
        %vm582 = vcmp.eq.f32.partialorder %v458, %v554
        %vm583 = vcmp.eq.f32.partialorder %v460, %v575
        %vm584 = vcmp.eq.f32.partialorder %v464, %v554
        %vm585 = vcmp.eq.f32.partialorder %v466, %v575
        %vm586 = vcmp.eq.f32.partialorder %v470, %v554
        %vm587 = vcmp.eq.f32.partialorder %v472, %v575
        %vm588 = vcmp.eq.f32.partialorder %v476, %v554
        %vm589 = vcmp.eq.f32.partialorder %v478, %v575
        %vm590 = vcmp.eq.f32.partialorder %v482, %v554
        %vm591 = vcmp.eq.f32.partialorder %v484, %v575
        %vm592 = vcmp.eq.f32.partialorder %v488, %v554
        %vm593 = vcmp.eq.f32.partialorder %v490, %v575
        %vm594 = vcmp.eq.f32.partialorder %v494, %v554
        %vm595 = vcmp.eq.f32.partialorder %v496, %v575
        %vm596 = vcmp.eq.f32.partialorder %v500, %v554
        %vm597 = vcmp.eq.f32.partialorder %v502, %v575
        %vm598 = vcmp.eq.f32.partialorder %v506, %v554
        %vm599 = vcmp.eq.f32.partialorder %v508, %v575
        %vm600 = vcmp.eq.f32.partialorder %v512, %v554
        %vm601 = vcmp.eq.f32.partialorder %v514, %v575
        %vm602 = vcmp.eq.f32.partialorder %v518, %v554
        %vm603 = vcmp.eq.f32.partialorder %v520, %v575
        %vm604 = vcmp.eq.f32.partialorder %v524, %v554
        %vm605 = vcmp.eq.f32.partialorder %v526, %v575
        %vm606 = vcmp.eq.f32.partialorder %v530, %v554
        %vm607 = vcmp.eq.f32.partialorder %v532, %v575
        %v608 = vsel %vm576, %v280, 128
        %v609 = vsel %vm577, %v280, 128
        %v610 = vsel %vm578, %v281, 128
        %v611 = vsel %vm579, %v281, 128
        %v612 = vsel %vm580, %v282, 128
        %v613 = vsel %vm581, %v282, 128
        %v614 = vsel %vm582, %v283, 128
        %v615 = vsel %vm583, %v283, 128
        %v616 = vsel %vm584, %v284, 128
        %v617 = vsel %vm585, %v284, 128
        %v618 = vsel %vm586, %v285, 128
        %v619 = vsel %vm587, %v285, 128
        %v620 = vsel %vm588, %v286, 128
        %v621 = vsel %vm589, %v286, 128
        %v622 = vsel %vm590, %v287, 128
        %v623 = vsel %vm591, %v287, 128
        %v624 = vsel %vm592, %v288, 128
        %v625 = vsel %vm593, %v288, 128
        %v626 = vsel %vm594, %v289, 128
        %v627 = vsel %vm595, %v289, 128
        %v628 = vsel %vm596, %v290, 128
        %v629 = vsel %vm597, %v290, 128
        %v630 = vsel %vm598, %v291, 128
        %v631 = vsel %vm599, %v291, 128
        %v632 = vsel %vm600, %v292, 128
        %v633 = vsel %vm601, %v292, 128
        %v634 = vsel %vm602, %v293, 128
        %v635 = vsel %vm603, %v293, 128
        %v636 = vsel %vm604, %v294, 128
        %v637 = vsel %vm605, %v294, 128
        %v638 = vsel %vm606, %v295, 128
        %v639 = vsel %vm607, %v295, 128
        %vm640 = vcmp.lt.s32.totalorder %v608, %v612
        %v641 = vsel %vm640, %v608, %v612
        %vm642 = vcmp.lt.s32.totalorder %v610, %v614
        %v643 = vsel %vm642, %v610, %v614
        %vm644 = vcmp.lt.s32.totalorder %v641, %v616
        %v645 = vsel %vm644, %v641, %v616
        %vm646 = vcmp.lt.s32.totalorder %v643, %v618
        %v647 = vsel %vm646, %v643, %v618
        %vm648 = vcmp.lt.s32.totalorder %v645, %v620
        %v649 = vsel %vm648, %v645, %v620
        %vm650 = vcmp.lt.s32.totalorder %v647, %v622
        %v651 = vsel %vm650, %v647, %v622
        %vm652 = vcmp.lt.s32.totalorder %v649, %v624
        %v653 = vsel %vm652, %v649, %v624
        %vm654 = vcmp.lt.s32.totalorder %v651, %v626
        %v655 = vsel %vm654, %v651, %v626
        %vm656 = vcmp.lt.s32.totalorder %v653, %v628
        %v657 = vsel %vm656, %v653, %v628
        %vm658 = vcmp.lt.s32.totalorder %v655, %v630
        %v659 = vsel %vm658, %v655, %v630
        %vm660 = vcmp.lt.s32.totalorder %v657, %v632
        %v661 = vsel %vm660, %v657, %v632
        %vm662 = vcmp.lt.s32.totalorder %v659, %v634
        %v663 = vsel %vm662, %v659, %v634
        %vm664 = vcmp.lt.s32.totalorder %v661, %v636
        %v665 = vsel %vm664, %v661, %v636
        %vm666 = vcmp.lt.s32.totalorder %v663, %v638
        %v667 = vsel %vm666, %v663, %v638
        %vm668 = vcmp.lt.s32.totalorder %v665, %v667
        %v669 = vsel %vm668, %v665, %v667
        %v670 = vrot.slane %v669, 4
        %vm671 = vcmp.lt.s32.totalorder %v669, %v670
        %v672 = vsel %vm671, %v669, %v670
        %v673 = vrot.slane %v672, 2
        %vm674 = vcmp.lt.s32.totalorder %v672, %v673
        %v675 = vsel %vm674, %v672, %v673
        %v676 = vrot.slane %v675, 1
        %vm677 = vcmp.lt.s32.totalorder %v675, %v676
        %v678 = vsel %vm677, %v675, %v676
        %vm679 = vcmp.lt.s32.totalorder %v609, %v613
        %v680 = vsel %vm679, %v609, %v613
        %vm681 = vcmp.lt.s32.totalorder %v611, %v615
        %v682 = vsel %vm681, %v611, %v615
        %vm683 = vcmp.lt.s32.totalorder %v680, %v617
        %v684 = vsel %vm683, %v680, %v617
        %vm685 = vcmp.lt.s32.totalorder %v682, %v619
        %v686 = vsel %vm685, %v682, %v619
        %vm687 = vcmp.lt.s32.totalorder %v684, %v621
        %v688 = vsel %vm687, %v684, %v621
        %vm689 = vcmp.lt.s32.totalorder %v686, %v623
        %v690 = vsel %vm689, %v686, %v623
        %vm691 = vcmp.lt.s32.totalorder %v688, %v625
        %v692 = vsel %vm691, %v688, %v625
        %vm693 = vcmp.lt.s32.totalorder %v690, %v627
        %v694 = vsel %vm693, %v690, %v627
        %vm695 = vcmp.lt.s32.totalorder %v692, %v629
        %v696 = vsel %vm695, %v692, %v629
        %vm697 = vcmp.lt.s32.totalorder %v694, %v631
        %v698 = vsel %vm697, %v694, %v631
        %vm699 = vcmp.lt.s32.totalorder %v696, %v633
        %v700 = vsel %vm699, %v696, %v633
        %vm701 = vcmp.lt.s32.totalorder %v698, %v635
        %v702 = vsel %vm701, %v698, %v635
        %vm703 = vcmp.lt.s32.totalorder %v700, %v637
        %v704 = vsel %vm703, %v700, %v637
        %vm705 = vcmp.lt.s32.totalorder %v702, %v639
        %v706 = vsel %vm705, %v702, %v639
        %vm707 = vcmp.lt.s32.totalorder %v704, %v706
        %v708 = vsel %vm707, %v704, %v706
        %v709 = vrot.slane %v708, 4
        %vm710 = vcmp.lt.s32.totalorder %v708, %v709
        %v711 = vsel %vm710, %v708, %v709
        %v712 = vrot.slane %v711, 2
        %vm713 = vcmp.lt.s32.totalorder %v711, %v712
        %v714 = vsel %vm713, %v711, %v712
        %v715 = vrot.slane %v714, 1
        %vm716 = vcmp.lt.s32.totalorder %v714, %v715
        %v717 = vsel %vm716, %v714, %v715
        %vm718 = vcmp.eq.s32.totalorder %v280, %v678
        %vm719 = vcmp.eq.s32.totalorder %v280, %v717
        %vm720 = vcmp.eq.s32.totalorder %v281, %v678
        %vm721 = vcmp.eq.s32.totalorder %v281, %v717
        %vm722 = vcmp.eq.s32.totalorder %v282, %v678
        %vm723 = vcmp.eq.s32.totalorder %v282, %v717
        %vm724 = vcmp.eq.s32.totalorder %v283, %v678
        %vm725 = vcmp.eq.s32.totalorder %v283, %v717
        %vm726 = vcmp.eq.s32.totalorder %v284, %v678
        %vm727 = vcmp.eq.s32.totalorder %v284, %v717
        %vm728 = vcmp.eq.s32.totalorder %v285, %v678
        %vm729 = vcmp.eq.s32.totalorder %v285, %v717
        %vm730 = vcmp.eq.s32.totalorder %v286, %v678
        %vm731 = vcmp.eq.s32.totalorder %v286, %v717
        %vm732 = vcmp.eq.s32.totalorder %v287, %v678
        %vm733 = vcmp.eq.s32.totalorder %v287, %v717
        %vm734 = vcmp.eq.s32.totalorder %v288, %v678
        %vm735 = vcmp.eq.s32.totalorder %v288, %v717
        %vm736 = vcmp.eq.s32.totalorder %v289, %v678
        %vm737 = vcmp.eq.s32.totalorder %v289, %v717
        %vm738 = vcmp.eq.s32.totalorder %v290, %v678
        %vm739 = vcmp.eq.s32.totalorder %v290, %v717
        %vm740 = vcmp.eq.s32.totalorder %v291, %v678
        %vm741 = vcmp.eq.s32.totalorder %v291, %v717
        %vm742 = vcmp.eq.s32.totalorder %v292, %v678
        %vm743 = vcmp.eq.s32.totalorder %v292, %v717
        %vm744 = vcmp.eq.s32.totalorder %v293, %v678
        %vm745 = vcmp.eq.s32.totalorder %v293, %v717
        %vm746 = vcmp.eq.s32.totalorder %v294, %v678
        %vm747 = vcmp.eq.s32.totalorder %v294, %v717
        %vm748 = vcmp.eq.s32.totalorder %v295, %v678
        %vm749 = vcmp.eq.s32.totalorder %v295, %v717
        %v750 = vsel %vm718, 1, 0
        %v751 = vsel %vm719, 1, 0
        %v752 = vsel %vm720, 1, 0
        %v753 = vsel %vm721, 1, 0
        %v754 = vsel %vm722, 1, 0
        %v755 = vsel %vm723, 1, 0
        %v756 = vsel %vm724, 1, 0
        %v757 = vsel %vm725, 1, 0
        %v758 = vsel %vm726, 1, 0
        %v759 = vsel %vm727, 1, 0
        %v760 = vsel %vm728, 1, 0
        %v761 = vsel %vm729, 1, 0
        %v762 = vsel %vm730, 1, 0
        %v763 = vsel %vm731, 1, 0
        %v764 = vsel %vm732, 1, 0
        %v765 = vsel %vm733, 1, 0
        %v766 = vsel %vm734, 1, 0
        %v767 = vsel %vm735, 1, 0
        %v768 = vsel %vm736, 1, 0
        %v769 = vsel %vm737, 1, 0
        %v770 = vsel %vm738, 1, 0
        %v771 = vsel %vm739, 1, 0
        %v772 = vsel %vm740, 1, 0
        %v773 = vsel %vm741, 1, 0
        %v774 = vsel %vm742, 1, 0
        %v775 = vsel %vm743, 1, 0
        %v776 = vsel %vm744, 1, 0
        %v777 = vsel %vm745, 1, 0
        %v778 = vsel %vm746, 1, 0
        %v779 = vsel %vm747, 1, 0
        %v780 = vsel %vm748, 1, 0
        %v781 = vsel %vm749, 1, 0
        %v782 = vcvt.s32.f32 %v750
        %v783 = vcvt.s32.f32 %v751
        %v784 = vcvt.s32.f32 %v752
        %v785 = vcvt.s32.f32 %v753
        %v786 = vcvt.s32.f32 %v754
        %v787 = vcvt.s32.f32 %v755
        %v788 = vcvt.s32.f32 %v756
        %v789 = vcvt.s32.f32 %v757
        %v790 = vcvt.s32.f32 %v758
        %v791 = vcvt.s32.f32 %v759
        %v792 = vcvt.s32.f32 %v760
        %v793 = vcvt.s32.f32 %v761
        %v794 = vcvt.s32.f32 %v762
        %v795 = vcvt.s32.f32 %v763
        %v796 = vcvt.s32.f32 %v764
        %v797 = vcvt.s32.f32 %v765
        %v798 = vcvt.s32.f32 %v766
        %v799 = vcvt.s32.f32 %v767
        %v800 = vcvt.s32.f32 %v768
        %v801 = vcvt.s32.f32 %v769
        %v802 = vcvt.s32.f32 %v770
        %v803 = vcvt.s32.f32 %v771
        %v804 = vcvt.s32.f32 %v772
        %v805 = vcvt.s32.f32 %v773
        %v806 = vcvt.s32.f32 %v774
        %v807 = vcvt.s32.f32 %v775
        %v808 = vcvt.s32.f32 %v776
        %v809 = vcvt.s32.f32 %v777
        %v810 = vcvt.s32.f32 %v778
        %v811 = vcvt.s32.f32 %v779
        %v812 = vcvt.s32.f32 %v780
        %v813 = vcvt.s32.f32 %v781
        %814 = vmatprep.subr.mxu0 %v783
        %815 = vmatpush1.msra.mxu0 %v782
        %816 = vmatprep.subr.mxu0 %v785
        %817 = vmatpush1.msra.mxu0 %v784
        %818 = vmatprep.subr.mxu0 %v787
        %819 = vmatpush1.msra.mxu0 %v786
        %820 = vmatprep.subr.mxu0 %v789
        %821 = vmatpush1.msra.mxu0 %v788
        %822 = vmatprep.subr.mxu0 %v791
        %823 = vmatpush1.msra.mxu0 %v790
        %824 = vmatprep.subr.mxu0 %v793
        %825 = vmatpush1.msra.mxu0 %v792
        %826 = vmatprep.subr.mxu0 %v795
        %827 = vmatpush1.msra.mxu0 %v794
        %828 = vmatprep.subr.mxu0 %v797
        %829 = vmatpush1.msra.mxu0 %v796
        %830 = vmatprep.subr.mxu0 %v799
        %831 = vmatpush1.msra.mxu0 %v798
        %832 = vmatprep.subr.mxu0 %v801
        %833 = vmatpush1.msra.mxu0 %v800
        %834 = vmatprep.subr.mxu0 %v803
        %835 = vmatpush1.msra.mxu0 %v802
        %836 = vmatprep.subr.mxu0 %v805
        %837 = vmatpush1.msra.mxu0 %v804
        %838 = vmatprep.subr.mxu0 %v807
        %839 = vmatpush1.msra.mxu0 %v806
        %840 = vmatprep.subr.mxu0 %v809
        %841 = vmatpush1.msra.mxu0 %v808
        %842 = vmatprep.subr.mxu0 %v811
        %843 = vmatpush1.msra.mxu0 %v810
        %844 = vmatprep.subr.mxu0 %v813
        %845 = vmatpush1.msra.mxu0 %v812
        %846 = vmatprep.subr.mxu0 0.0
        %847 = vmatpush1.msra.mxu0 0.0
        %848 = vmatprep.subr.mxu0 0.0
        %849 = vmatpush1.msra.mxu0 0.0
        %850 = vmatprep.subr.mxu0 0.0
        %851 = vmatpush1.msra.mxu0 0.0
        %852 = vmatprep.subr.mxu0 0.0
        %853 = vmatpush1.msra.mxu0 0.0
        %854 = vmatprep.subr.mxu0 0.0
        %855 = vmatpush1.msra.mxu0 0.0
        %856 = vmatprep.subr.mxu0 0.0
        %857 = vmatpush1.msra.mxu0 0.0
        %858 = vmatprep.subr.mxu0 0.0
        %859 = vmatpush1.msra.mxu0 0.0
        %860 = vmatprep.subr.mxu0 0.0
        %861 = vmatpush1.msra.mxu0 0.0
        %862 = vmatprep.subr.mxu0 0.0
        %863 = vmatpush1.msra.mxu0 0.0
        %864 = vmatprep.subr.mxu0 0.0
        %865 = vmatpush1.msra.mxu0 0.0
        %866 = vmatprep.subr.mxu0 0.0
        %867 = vmatpush1.msra.mxu0 0.0
        %868 = vmatprep.subr.mxu0 0.0
        %869 = vmatpush1.msra.mxu0 0.0
        %870 = vmatprep.subr.mxu0 0.0
        %871 = vmatpush1.msra.mxu0 0.0
        %872 = vmatprep.subr.mxu0 0.0
        %873 = vmatpush1.msra.mxu0 0.0
        %874 = vmatprep.subr.mxu0 0.0
        %875 = vmatpush1.msra.mxu0 0.0
        %876 = vmatprep.subr.mxu0 0.0
        %877 = vmatpush1.msra.mxu0 0.0
        %878 = vmatprep.mubr.f32.mxu0 0.0
        %879 = vmatmul.mubr.f32.gmra.mrb[0].mxu0 %v320
        %v880 = vpop.f32.mrb[0].mxu0
        %v881 = vadd.f32 0.0, %v880
        %v882 = vpop.f32.mrb[0].mxu0
        %v883 = vadd.f32 0.0, %v882
        %884 = vmatprep.mubr.f32.mxu0 0.0
        %885 = vmatmul.mubr.f32.gmra.mrb[0].mxu0 %v321
        %v886 = vpop.f32.mrb[0].mxu0
        %v887 = vadd.f32 0.0, %v886
        %v888 = vpop.f32.mrb[0].mxu0
        %v889 = vadd.f32 0.0, %v888
        %890 = vmatprep.mubr.f32.mxu0 0.0
        %891 = vmatmul.mubr.f32.gmra.mrb[0].mxu0 %v322
        %v892 = vpop.f32.mrb[0].mxu0
        %v893 = vadd.f32 0.0, %v892
        %v894 = vpop.f32.mrb[0].mxu0
        %v895 = vadd.f32 0.0, %v894
        %896 = vmatprep.mubr.f32.mxu0 0.0
        %897 = vmatmul.mubr.f32.gmra.mrb[0].mxu0 %v323
        %v898 = vpop.f32.mrb[0].mxu0
        %v899 = vadd.f32 0.0, %v898
        %v900 = vpop.f32.mrb[0].mxu0
        %v901 = vadd.f32 0.0, %v900
        %902 = vdwg.mxu0
        %903 = vst [vmem:[%s268] sm:$0xff] %v881
        %904 = vst [vmem:[%s268 + $0x8] sm:$0xff] %v883
        %905 = vst [vmem:[%s268 + $0x10] sm:$0xff] %v887
        %906 = vst [vmem:[%s268 + $0x18] sm:$0xff] %v889
        %907 = vst [vmem:[%s268 + $0x20] sm:$0xff] %v893
        %908 = vst [vmem:[%s268 + $0x28] sm:$0xff] %v895
        %909 = vst [vmem:[%s268 + $0x30] sm:$0xff] %v899
        %910 = vst [vmem:[%s268 + $0x38] sm:$0xff] %v901
        %v911 = vcombine.low %v678, %v717
        %v913 = vunpack.c.l.s4 1966171168
        %v914 = vunpack.c.0.s8 %v913
        %v915 = vlaneseq
        %v916 = vshrl.u32 %v915, 7
        %v917 = vsub.s32 %v914, %v916
        %v918 = vrot.slane %v911, %v917
        %v920 = vunpack.c.l.s4 1966171168
        %v921 = vunpack.c.0.s8 %v920
        %v922 = vlaneseq
        %v923 = vshrl.u32 %v922, 7
        %v924 = vsub.s32 %v921, %v923
        %v925 = vrot.slane %v918, %v924
        %v926 = vlaneseq
        %vm927 = vcmp.ge.s32.totalorder %v926, 0
        %vm928 = vcmp.lt.s32.totalorder %v926, 256
        %vm929 = vmand %vm927, %vm928
        %930 = vst.msk [vmem:[%s275] sm:$0x3] %vm929, %v925
        %s931 = sand.u32 %s118, 1
        %s932 = scalar_lea.sflag [#allocation4], %s931
        %s933 = sand.u32 %s118, 1
        %s934 = smul.addr %s933, 64
        %s935 = scalar_lea.vmem [#allocation8], %s934
        %s936 = sand.u32 %s146, 1
        %s937 = scalar_lea.sflag [#allocation10], %s936
        %s938 = sand.u32 %s146, 1
        %s939 = smul.addr %s938, 2
        %s940 = scalar_lea.vmem [#allocation9], %s939
        // Predicated region
        $region45: #{tpu_custom_call.1} parent=31 // pred_check
          %p941 = pneg %p128
        $region46: #{tpu_custom_call.1} parent=31 // pred_check_branch
          %943 = sbr.rel (%p941) target = $region48
        $region47: #{tpu_custom_call.1} parent=31 // pred_region
          %s944 = smul.u32 2, %s31
          %s946 = ssub.s32 1024, 1024
          %947 = vsyncadd %s932, %s946
          %s948 = smul.addr %s30, 8
          %s949 = sadd.s32 %s944, %s948
          %s950 = smul.addr %s949, 128
          %s951 = scalar_lea.hbm %s3, %s950
          %s952 = sshll.u32 %s935, 4
          %s953 = int_to_ptr.vmem [resolvable:$true] %s952
          %958 = dma.vmem_to_hbm [thread:$0]  %s953, 1024, %s951, %s932, 256, 256, 16
        $region48: #{tpu_custom_call.1} parent=31 // pred_fallthru
          _
        // Predicated region
        $region49: #{tpu_custom_call.1} parent=31 // pred_check
          %p959 = pneg %p156
        $region50: #{tpu_custom_call.1} parent=31 // pred_check_branch
          %961 = sbr.rel (%p959) target = $region52
        $region51: #{tpu_custom_call.1} parent=31 // pred_region
          %s962 = smul.u32 2, %s31
          %s964 = ssub.s32 32, 32
          %965 = vsyncadd %s937, %s964
          %s966 = smul.addr %s30, 2
          %s967 = sadd.s32 %s962, %s966
          %s968 = smul.addr %s967, 16
          %s969 = scalar_lea.hbm %s4, %s968
          %s971 = sshll.u32 %s940, 4
          %s972 = int_to_ptr.vmem [resolvable:$true] %s971
          %974 = dma.vmem_to_hbm [thread:$0]  %s972, 32, %s969, %s937
        $region52: #{tpu_custom_call.1} parent=31 // pred_fallthru
          _
      $region32: #{tpu_custom_call.1} parent=5 // pred_fallthru
        _
      %p975 = scmp.le.s32.totalorder 2, %s21
      // Predicated region
      $region53: #{tpu_custom_call.1} parent=5 // pred_check
        %p976 = pneg %p975
      $region54: #{tpu_custom_call.1} parent=5 // pred_check_branch
        %978 = sbr.rel (%p976) target = $region56
      $region55: #{tpu_custom_call.1} parent=5 // pred_region
        %s979 = ssub.s32 %s21, 2
        // Predicated region
        $region57: #{tpu_custom_call.1} parent=55 // pred_check
          %p980 = pneg %p134
        $region58: #{tpu_custom_call.1} parent=55 // pred_check_branch
          %982 = sbr.rel (%p980) target = $region60
        $region59: #{tpu_custom_call.1} parent=55 // pred_region
          %s983 = sand.u32 %s119, 1
          %s984 = scalar_lea.sflag [#allocation4], %s983
          %s985 = sand.u32 %s119, 1
          %s986 = smul.addr %s985, 64
          %s987 = scalar_lea.vmem [#allocation8], %s986
          %988 = dma.done %s984, 1024
        $region60: #{tpu_custom_call.1} parent=55 // pred_fallthru
          _
        // Predicated region
        $region61: #{tpu_custom_call.1} parent=55 // pred_check
          %p989 = pneg %p162
        $region62: #{tpu_custom_call.1} parent=55 // pred_check_branch
          %991 = sbr.rel (%p989) target = $region64
        $region63: #{tpu_custom_call.1} parent=55 // pred_region
          %s992 = sand.u32 %s147, 1
          %s993 = scalar_lea.sflag [#allocation10], %s992
          %s994 = sand.u32 %s147, 1
          %s995 = smul.addr %s994, 2
          %s996 = scalar_lea.vmem [#allocation9], %s995
          %997 = dma.done %s993, 32
        $region64: #{tpu_custom_call.1} parent=55 // pred_fallthru
          _
      $region56: #{tpu_custom_call.1} parent=5 // pred_fallthru
        _
    $region6: #{tpu_custom_call.1} parent=1 // loop_footer
      %s25 = sadd.s32 1, %s21
    $region7: #{tpu_custom_call.1} parent=1 // loop_footer_branch
      %20 = sbr.rel target = $region3
    $region8: #{tpu_custom_call.1} parent=1 // loop_exit
      _
    %998 = vsyncpa [#allocation3], 1
    %s999 = scalar_lea.sflag [#allocation3], 1
    %1000 = vsyncpa %s999, 1
    %1001 = vsyncpa [#allocation6], 1
    %1002 = vsyncpa [#allocation4], 1
    %s1003 = scalar_lea.sflag [#allocation4], 1
    %1004 = vsyncpa %s1003, 1
    %1005 = vsyncpa [#allocation10], 1
    %s1006 = scalar_lea.sflag [#allocation10], 1
    %1007 = vsyncpa %s1006, 1

</llo_original>
